<compile_context>
chip_gen: v7x
topology: tpu7x:2x2x1
jax: 0.10.0
libtpu: 0.0.40
codegen_flags: <defaults>
</compile_context>

<pallas_src>
import functools
import math

import jax
import jax.numpy as jnp
from jax.experimental import pallas as pl
from jax.experimental.pallas import tpu as pltpu


_MIB = 1024 * 1024


def _query_vmem_capacity_bytes():
    try:
        return int(pltpu.get_tpu_info().vmem_capacity_bytes)
    except Exception:
        return 64 * _MIB                       # conservative: v7x per-TC VMEM


_VMEM_CAPACITY = _query_vmem_capacity_bytes()
# Scoped-VMEM request: 32 MiB is safe on every generation (== v6e/v7x scoped
# default); allow 64 MiB where 128 MiB of physical VMEM exists (v5e/v6e).
_VMEM_LIMIT_BYTES = 64 * _MIB if _VMEM_CAPACITY > 64 * _MIB else 32 * _MIB
# Per-input-block budget (padded bytes): 2 inputs x 2 pipeline buffers x this
# is half the scoped limit, leaving headroom for accumulator + compiler.
_BLOCK_BUDGET_BYTES = _VMEM_LIMIT_BYTES // 8
# Budget for the lag>0 per-batch path (both tensors, double-buffered, padded).
_BATCH_SLAB_BUDGET_BYTES = _VMEM_LIMIT_BYTES // 2


def _ceil_to(x, m):
    return ((x + m - 1) // m) * m


def _padded_block_bytes(rows, width, itemsize):
    """VMEM footprint of a (rows, width) block, padded to (8, 128) tiles."""
    return _ceil_to(max(rows, 1), 8) * _ceil_to(max(width, 1), 128) * itemsize


def _choose_pack_factor(n, n_rows):
    """Pick k so (n_rows, n) can be viewed as (n_rows//k, k*n) with denser lanes."""
    if n % 128 == 0 or n_rows <= 1:
        return 1
    ideal = 128 // math.gcd(n, 128)            # smallest k with (k*n) % 128 == 0
    ideal = min(ideal, 32, n_rows)
    for k in range(ideal, 1, -1):
        if n_rows % k == 0:
            return k
    return 1


def _choose_row_tile(n_rows, width, itemsize, budget=_BLOCK_BUDGET_BYTES):
    """Largest row tile (multiple of 8, or full) whose padded bytes fit the budget."""
    padded_row_bytes = _ceil_to(width, 128) * itemsize
    rows_cap = max(8, budget // max(1, padded_row_bytes))
    if n_rows <= rows_cap:
        return n_rows
    return max(8, (rows_cap // 8) * 8)


def _accumulate_partial(acc_ref, loss):
    """Accumulate (rows, W) f32 `loss` into the (8, W) partial-sum output ref.

    When `rows` is a multiple of 8 this is pure VPU work (adds of sublane
    groups); the single cross-sublane reduce happens once, in the wrapper.
    """
    rows, w = loss.shape
    if rows % 8 == 0:
        acc_ref[...] += loss.reshape(rows // 8, 8, w).sum(axis=0)
    else:
        s = jnp.sum(loss, axis=0, keepdims=True)                 # (1, W)
        row = jax.lax.broadcasted_iota(jnp.int32, (8, w), 0)
        acc_ref[...] += jnp.where(row == 0, s, jnp.float32(0.0))


def _poisson_rows_kernel(out_ref, tgt_ref, acc_ref, *, bias, n_rows,
                         n_splits, tiles_per_split, has_tail):
    """Row-tiled path: out_ref/tgt_ref are (tR, W) tiles of the flattened (R, W)."""
    c = pl.program_id(0)          # TensorCore / stream split ("parallel")
    i = pl.program_id(1)          # row tile within the split ("arbitrary")

    @pl.when(i == 0)
    def _():
        acc_ref[...] = jnp.zeros_like(acc_ref)

    t_rows, w = out_ref.shape
    o = out_ref[...].astype(jnp.float32)
    t = tgt_ref[...].astype(jnp.float32)

    if not has_tail:
        _accumulate_partial(acc_ref, o - t * jnp.log(o + bias))
    else:
        is_last = jnp.logical_and(c == n_splits - 1, i == tiles_per_split - 1)

        @pl.when(jnp.logical_not(is_last))
        def _():
            _accumulate_partial(acc_ref, o - t * jnp.log(o + bias))

        @pl.when(is_last)
        def _():
            # Only the last (partial) tile pays for the mask; inputs are masked
            # to safe values *before* the log so no NaN/Inf flows into select.
            row0 = (n_splits * tiles_per_split - 1) * t_rows
            row = row0 + jax.lax.broadcasted_iota(jnp.int32, (t_rows, w), 0)
            valid = row < n_rows
            o_m = jnp.where(valid, o, jnp.float32(1.0))
            t_m = jnp.where(valid, t, jnp.float32(0.0))
            loss = jnp.where(valid, o_m - t_m * jnp.log(o_m + bias), jnp.float32(0.0))
            _accumulate_partial(acc_ref, loss)


def _poisson_batch_kernel(out_ref, tgt_ref, acc_ref, *, bias, lag):
    """Per-batch path: out_ref is (T, N), tgt_ref is (T_tgt, N); lag is static."""
    b = pl.program_id(1)

    @pl.when(b == 0)
    def _():
        acc_ref[...] = jnp.zeros_like(acc_ref)

    t_len = out_ref.shape[0]
    o = out_ref[...].astype(jnp.float32)
    tgt = tgt_ref[...].astype(jnp.float32)
    # TODO(synk): for large lag a manual DMA starting at row `lag` (or an
    # element-offset index map) would avoid streaming the lag rows from HBM.
    t = tgt[lag:lag + t_len, :]                 # static slice, done in VMEM
    _accumulate_partial(acc_ref, o - t * jnp.log(o + bias))


def _per_neuron_partial_rows(out2d, tgt2d, bias, row_tile=None):
    n_rows, n = out2d.shape

    # Lane packing: view (R, N) as (R/k, k*N) (free for contiguous arrays).
    k = _choose_pack_factor(n, n_rows)
    if k > 1:
        out2d = out2d.reshape(n_rows // k, k * n)
        tgt2d = tgt2d.reshape(n_rows // k, k * n)
    rp, w = out2d.shape

    itemsize = max(out2d.dtype.itemsize, tgt2d.dtype.itemsize)
    if row_tile is not None:
        t_rows = row_tile
        if t_rows != rp and t_rows % 8 != 0:
            raise ValueError("row tile must be a multiple of 8 or the full row count")
    else:
        t_rows = _choose_row_tile(rp, w, itemsize)

    tiles_total = -(-rp // t_rows)
    if tiles_total >= 2 and tiles_total % 2 == 0:
        n_splits, tiles_per_split = 2, tiles_total // 2   # engage both TCs on v7x
    else:
        n_splits, tiles_per_split = 1, tiles_total
    has_tail = (rp % t_rows) != 0

    kernel = functools.partial(
        _poisson_rows_kernel, bias=bias, n_rows=rp,
        n_splits=n_splits, tiles_per_split=tiles_per_split, has_tail=has_tail)
    cost = pl.CostEstimate(
        flops=4 * rp * w,
        transcendentals=rp * w,
        bytes_accessed=rp * w * (out2d.dtype.itemsize + tgt2d.dtype.itemsize)
                       + n_splits * 8 * w * 4,
    )
    acc = pl.pallas_call(
        kernel,
        out_shape=jax.ShapeDtypeStruct((n_splits, 8, w), jnp.float32),
        grid_spec=pltpu.PrefetchScalarGridSpec(
            num_scalar_prefetch=0,
            grid=(n_splits, tiles_per_split),
            in_specs=[
                pl.BlockSpec((t_rows, w), lambda c, i: (c * tiles_per_split + i, 0)),
                pl.BlockSpec((t_rows, w), lambda c, i: (c * tiles_per_split + i, 0)),
            ],
            out_specs=pl.BlockSpec((None, 8, w), lambda c, i: (c, 0, 0)),
        ),
        compiler_params=pltpu.CompilerParams(
            dimension_semantics=("parallel", "arbitrary"),
            vmem_limit_bytes=_VMEM_LIMIT_BYTES,
        ),
        cost_estimate=cost,
    )(out2d, tgt2d)
    # Fold split slabs, 8 sublane partials and k lane groups back onto N.
    return acc.reshape(-1, n).sum(axis=0)


def _per_neuron_partial_batched(output, target, lag, bias):
    b, t_len, n = output.shape
    t_tgt = target.shape[1]
    n_splits = 2 if (b >= 2 and b % 2 == 0) else 1
    b_per = b // n_splits

    kernel = functools.partial(_poisson_batch_kernel, bias=bias, lag=lag)
    cost = pl.CostEstimate(
        flops=4 * b * t_len * n,
        transcendentals=b * t_len * n,
        bytes_accessed=b * n * (t_len * output.dtype.itemsize
                                + t_tgt * target.dtype.itemsize) + n_splits * 8 * n * 4,
    )
    acc = pl.pallas_call(
        kernel,
        out_shape=jax.ShapeDtypeStruct((n_splits, 8, n), jnp.float32),
        grid_spec=pltpu.PrefetchScalarGridSpec(
            num_scalar_prefetch=0,
            grid=(n_splits, b_per),
            in_specs=[
                pl.BlockSpec((None, t_len, n), lambda c, j: (c * b_per + j, 0, 0)),
                pl.BlockSpec((None, t_tgt, n), lambda c, j: (c * b_per + j, 0, 0)),
            ],
            out_specs=pl.BlockSpec((None, 8, n), lambda c, j: (c, 0, 0)),
        ),
        compiler_params=pltpu.CompilerParams(
            dimension_semantics=("parallel", "arbitrary"),
            vmem_limit_bytes=_VMEM_LIMIT_BYTES,
        ),
        cost_estimate=cost,
    )(output, target)
    return acc.reshape(-1, n).sum(axis=0)


class PoissonLoss3d:
    """Pallas TPU implementation of openretina's PoissonLoss3d forward pass."""

    def __init__(self, bias: float = 1e-16, per_neuron: bool = False, avg: bool = False,
                 *, _force_rows: bool = False, _row_tile=None):
        self.bias = float(bias)
        self.per_neuron = per_neuron
        self.avg = avg
        self._force_rows = _force_rows     # testing hook: force the row-tiled path
        self._row_tile = _row_tile         # testing hook: force a (packed) row tile

    def __call__(self, output, target):
        B, T, N = output.shape
        T_tgt = target.shape[1]
        lag = T_tgt - T

        # Padding-aware, double-buffered per-batch slab size (path selection).
        slab_bytes = 2 * (_padded_block_bytes(T, N, output.dtype.itemsize)
                          + _padded_block_bytes(T_tgt, N, target.dtype.itemsize))

        if lag > 0 and not self._force_rows and slab_bytes <= _BATCH_SLAB_BUDGET_BYTES:
            # Full target block per batch; lag handled by a static slice inside
            # the kernel (no HBM slice copy before the kernel).
            per_neuron_sum = _per_neuron_partial_batched(output, target, lag, self.bias)
        else:
            if lag > 0:
                # TODO(synk): very long recordings still materialize the lag
                # slice in HBM here; a manual-DMA / element-offset target fetch
                # would remove this extra read+write pass over target.
                target = jax.lax.slice_in_dim(target, lag, lag + T, axis=1)
            out2d = output.reshape(B * T, N)     # free reshape (contiguous merge)
            tgt2d = target.reshape(B * T, N)
            per_neuron_sum = _per_neuron_partial_rows(out2d, tgt2d, self.bias,
                                                      row_tile=self._row_tile)

        if self.per_neuron:
            # loss.view(-1, N).mean(dim=0) == per-neuron sum / (B*T)
            return per_neuron_sum / jnp.float32(B * T)
        total = jnp.sum(per_neuron_sum)
        if self.avg:
            return total / jnp.float32(B * T * N)
        return total

    def __str__(self):
        return (f"PoissonLoss3d(bias={self.bias!r} per_neuron={self.per_neuron!r} "
                f"avg={self.avg!r})")


def _reference(output, target, bias=1e-16, per_neuron=False, avg=False):
    lag = target.shape[1] - output.shape[1]
    loss = output - target[:, lag:, :] * jnp.log(output + bias)
    if not per_neuron:
        return loss.mean() if avg else loss.sum()
    return loss.reshape(-1, loss.shape[-1]).mean(axis=0)


if __name__ == "__main__":
    key = jax.random.PRNGKey(0)

    cases = [
        # (B, T_out, T_tgt, N, force_rows, row_tile)
        (2, 8, 12, 32, False, None),   # lag > 0  -> per-batch kernel, in-kernel lag slice, 2-way split
        (2, 8, 8, 32, False, None),    # lag == 0 -> row path, lane-packed k=4, single tile
        (2, 7, 12, 32, False, None),   # T % 8 != 0 accumulation branch (batched path)
        (3, 10, 13, 32, True, 8),      # forced rows: pre-slice, k=3 packing, 2-way split + tail mask
        (4, 16, 16, 32, True, 8),      # lag == 0, k=4 packing, 2-way split, no tail
        (2, 8, 8, 128, False, None),   # N already lane-dense (no packing)
        (1, 9, 9, 48, True, None),     # odd shapes: k=3 packing, <8 packed rows
    ]

    failures = []
    for (B, T_out, T_tgt, N, force_rows, row_tile) in cases:
        key, k1, k2 = jax.random.split(key, 3)
        output = jax.nn.softplus(jax.random.normal(k1, (B, T_out, N), dtype=jnp.float32))
        target = jax.random.poisson(k2, lam=1.0, shape=(B, T_tgt, N)).astype(jnp.float32)

        for per_neuron, avg in [(False, False), (False, True), (True, False)]:
            loss_fn = PoissonLoss3d(bias=1e-16, per_neuron=per_neuron, avg=avg,
                                    _force_rows=force_rows, _row_tile=row_tile)
            got = jax.block_until_ready(loss_fn(output, target))
            ref = _reference(output, target, bias=1e-16, per_neuron=per_neuron, avg=avg)
            if not jnp.allclose(got, ref, rtol=1e-5, atol=1e-5):
                failures.append(
                    f"B={B} T_out={T_out} T_tgt={T_tgt} N={N} force_rows={force_rows} "
                    f"per_neuron={per_neuron} avg={avg}: {got} vs {ref}")

    if failures:
        for f in failures:
            print("MISMATCH", f)
    else:
        print("KERNEL_OK")
</pallas_src>

<mosaic_0001>
module attributes {stable_mosaic.version = 11 : i64} {
  func.func @_poisson_batch_kernel(%arg0: i32, %arg1: i32, %arg2: memref<1x8x32xf32, #tpu.memory_space<vmem>>, %arg3: memref<1x12x32xf32, #tpu.memory_space<vmem>>, %arg4: memref<1x8x32xf32, #tpu.memory_space<vmem>>) attributes {dimension_semantics = [#tpu.dimension_semantics<parallel>, #tpu.dimension_semantics<arbitrary>], iteration_bounds = array<i64: 2, 1>, scalar_prefetch = 0 : i64, scratch_operands = 0 : i64, tpu.core_type = #tpu.core_type<tc>, window_params = [{transform_indices = @transform_0, window_bounds = array<i64: 1, 8, 32>}, {transform_indices = @transform_1, window_bounds = array<i64: 1, 12, 32>}, {transform_indices = @transform_2, window_bounds = array<i64: 1, 8, 32>}]} {
    %c0_i32 = arith.constant 0 : i32
    %0 = arith.cmpi eq, %arg1, %c0_i32 : i32
    %1 = arith.extui %0 : i1 to i32
    %c0_i32_0 = arith.constant 0 : i32
    %2 = arith.cmpi ne, %1, %c0_i32_0 : i32
    scf.if %2 {
      %cst_13 = arith.constant 0.000000e+00 : f32
      %21 = vector.broadcast %cst_13 : f32 to vector<8x32xf32>
      %c0_14 = arith.constant 0 : index
      %c0_15 = arith.constant 0 : index
      %c0_16 = arith.constant 0 : index
      %22 = vector.load %arg4[%c0_14, %c0_15, %c0_16] : memref<1x8x32xf32, #tpu.memory_space<vmem>>, vector<1x8x32xf32>
      %23 = vector.shape_cast %22 : vector<1x8x32xf32> to vector<8x32xf32>
      %24 = vector.shape_cast %21 : vector<8x32xf32> to vector<1x8x32xf32>
      tpu.vector_store %arg4[%c0_14, %c0_15, %c0_16], %24 {strides = array<i32>} : memref<1x8x32xf32, #tpu.memory_space<vmem>>, vector<1x8x32xf32>,
    } else {
    }
    %c0 = arith.constant 0 : index
    %c0_1 = arith.constant 0 : index
    %c0_2 = arith.constant 0 : index
    %3 = vector.load %arg2[%c0, %c0_1, %c0_2] : memref<1x8x32xf32, #tpu.memory_space<vmem>>, vector<1x8x32xf32>
    %4 = vector.shape_cast %3 : vector<1x8x32xf32> to vector<8x32xf32>
    %c0_3 = arith.constant 0 : index
    %c0_4 = arith.constant 0 : index
    %c0_5 = arith.constant 0 : index
    %5 = vector.load %arg3[%c0_3, %c0_4, %c0_5] : memref<1x12x32xf32, #tpu.memory_space<vmem>>, vector<1x12x32xf32>
    %6 = vector.shape_cast %5 : vector<1x12x32xf32> to vector<12x32xf32>
    %7 = vector.extract_strided_slice %6 {offsets = [4, 0], sizes = [8, 32], strides = [1, 1]} : vector<12x32xf32> to vector<8x32xf32>
    %cst = arith.constant 1.000000e-16 : f32
    %8 = vector.broadcast %cst : f32 to vector<8x32xf32>
    %9 = arith.addf %4, %8 : vector<8x32xf32>
    %10 = math.log %9 : vector<8x32xf32>
    %11 = arith.mulf %7, %10 : vector<8x32xf32>
    %12 = arith.subf %4, %11 : vector<8x32xf32>
    %c0_6 = arith.constant 0 : index
    %c0_7 = arith.constant 0 : index
    %c0_8 = arith.constant 0 : index
    %13 = vector.load %arg4[%c0_6, %c0_7, %c0_8] : memref<1x8x32xf32, #tpu.memory_space<vmem>>, vector<1x8x32xf32>
    %14 = vector.shape_cast %13 : vector<1x8x32xf32> to vector<8x32xf32>
    %15 = vector.shape_cast %12 : vector<8x32xf32> to vector<1x8x32xf32>
    %cst_9 = arith.constant dense<0.000000e+00> : vector<8x32xf32>
    %16 = vector.multi_reduction <add>, %15, %cst_9 [0] : vector<1x8x32xf32> to vector<8x32xf32>
    %17 = arith.addf %14, %16 : vector<8x32xf32>
    %c0_10 = arith.constant 0 : index
    %c0_11 = arith.constant 0 : index
    %c0_12 = arith.constant 0 : index
    %18 = vector.load %arg4[%c0_10, %c0_11, %c0_12] : memref<1x8x32xf32, #tpu.memory_space<vmem>>, vector<1x8x32xf32>
    %19 = vector.shape_cast %18 : vector<1x8x32xf32> to vector<8x32xf32>
    %20 = vector.shape_cast %17 : vector<8x32xf32> to vector<1x8x32xf32>
    tpu.vector_store %arg4[%c0_10, %c0_11, %c0_12], %20 {strides = array<i32>} : memref<1x8x32xf32, #tpu.memory_space<vmem>>, vector<1x8x32xf32>,
    return
  }
  func.func @transform_0(%arg0: i32, %arg1: i32) -> (i32, i32, i32) {
    %c1_i32 = arith.constant 1 : i32
    %0 = arith.muli %arg0, %c1_i32 : i32
    %1 = arith.addi %0, %arg1 : i32
    %c0_i32 = arith.constant 0 : i32
    %c0_i32_0 = arith.constant 0 : i32
    %c0_i32_1 = arith.constant 0 : i32
    return %1, %c0_i32, %c0_i32_0 : i32, i32, i32
  }
  func.func @transform_1(%arg0: i32, %arg1: i32) -> (i32, i32, i32) {
    %c1_i32 = arith.constant 1 : i32
    %0 = arith.muli %arg0, %c1_i32 : i32
    %1 = arith.addi %0, %arg1 : i32
    %c0_i32 = arith.constant 0 : i32
    %c0_i32_0 = arith.constant 0 : i32
    %c0_i32_1 = arith.constant 0 : i32
    return %1, %c0_i32, %c0_i32_0 : i32, i32, i32
  }
  func.func @transform_2(%arg0: i32, %arg1: i32) -> (i32, i32, i32) {
    %c0_i32 = arith.constant 0 : i32
    %c0_i32_0 = arith.constant 0 : i32
    %c0_i32_1 = arith.constant 0 : i32
    return %arg0, %c0_i32, %c0_i32_0 : i32, i32, i32
  }
}

</mosaic_0001>

<llo_original>
// kernel: tpu_custom_call.1
$region0: #{tpu_custom_call.1}
  #allocation0 [shape = 'u32[]', space=smem, size = 0x4, offset = 0x4, fixed_abs, tag = 'smem constant byte address 0x4 - core index']
  #allocation1 [shape = 'u32[144,128]{1,0:T(1,128)}', space=vmem, size = 0x12000, scoped, tag = 'internal scratch']
  %s0 = inlined_call_operand.vmem [shape: f32[2,8,32], index: 0, kind: input, shape index: {}]
  %s1 = inlined_call_operand.vmem [shape: f32[2,12,32], index: 1, kind: input, shape index: {}]
  %s2 = inlined_call_operand.hbm [shape: f32[2,8,32], index: 2, kind: output, shape index: {}]
  %s3 = sld [smem:[#allocation0]]
  $region45: #{tpu_custom_call.1} parent=0
    _
  %s5 = ssub.s32 1, %s3
  %s6 = scalar_select 0, %s5, %s3
  $region1: #{tpu_custom_call.1} parent=0
    #allocation2 [shape = 'u8[8192]{0}', space=vmem, size = 0x2000, scoped, tag = 'output window, operand 0']
    #allocation3 [shape = 's32[2]{0}', space=sflag, size = 0x8, scoped, tag = 'scoped memory for tpu_custom_call.1']
    %7 = vsyncpa [#allocation3], 0
    %s8 = scalar_lea.sflag [#allocation3], 1
    %9 = vsyncpa %s8, 0
    loop: start=0, step=1, limit=4
    $region2: #{tpu_custom_call.1} parent=1 // loop_pre_header
      _
    $region3: #{tpu_custom_call.1} parent=1 // loop_header
      %s11 = sphi 0, %s15
      %p12 = scmp.ge.s32.totalorder %s11, 4
      %s18 = sphi 0, %s30
      %s19 = sphi 0, %s26
      %s20 = sphi 0, %s18
      %s21 = sphi 0, %s19
      %s22 = sphi 0, %s20
      %s23 = sphi 0, %s21
      %s35 = sphi 0, %s37
      %s38 = sphi 0, %s35
      %s39 = sphi 0, %s38
      %s55 = sphi 0, %s39
      %s63 = sphi 0, %s65
      %s66 = sphi 0, %s63
      %s67 = sphi 0, %s66
      %s83 = sphi 0, %s67
      %s89 = sphi 0, %s91
      %s92 = sphi 0, %s89
      %s93 = sphi 0, %s92
      %s109 = sphi 0, %s93
    $region4: #{tpu_custom_call.1} parent=1 // loop_header_branch
      %14 = sbr.rel (%p12) target = $region8
    $region5: #{tpu_custom_call.1} parent=1 // loop_body
      %s16 = ssub.s32 %s11, 1
      %s17 = ssub.s32 %s11, 2
      %s24 = sadd.s32 1, %s19
      %p25 = scmp.ge.s32.totalorder %s24, 1
      %s26 = scalar_select %p25, 0, %s24
      %s27 = sadd.s32 1, %s18
      %s28 = scalar_select %p25, %s27, %s18
      %p29 = scmp.ge.s32.totalorder %s28, 2
      %s30 = scalar_select %p29, 0, %s28
      %s31 = sadd.s32 %s18, %s19
      %s32 = sadd.s32 %s30, %s26
      %s33 = ssub.s32 %s31, %s32
      %p34 = scmp.eq.s32.totalorder %s33, 0
      %s36 = sadd.s32 %s35, 1
      %s37 = scalar_select %p34, %s35, %s36
      %p40 = pneg %p34
      %p41 = scmp.eq.s32.totalorder %s11, 1
      %p42 = por %p40, %p41
      %p43 = scmp.ne.s32.totalorder %s35, %s38
      %p44 = scmp.eq.s32.totalorder %s11, 0
      %p45 = por %p43, %p44
      %p46 = scmp.ne.s32.totalorder %s35, %s38
      %p47 = scmp.eq.s32.totalorder %s16, 1
      %p48 = por %p46, %p47
      %p49 = scmp.ne.s32.totalorder %s38, %s39
      %p50 = scmp.eq.s32.totalorder %s16, 0
      %p51 = por %p49, %p50
      %p52 = scmp.ne.s32.totalorder %s38, %s39
      %p53 = scmp.eq.s32.totalorder %s17, 1
      %p54 = por %p52, %p53
      %p56 = scmp.ne.s32.totalorder %s39, %s55
      %p57 = scmp.eq.s32.totalorder %s17, 0
      %p58 = por %p56, %p57
      %s59 = sadd.s32 %s18, %s19
      %s60 = sadd.s32 %s30, %s26
      %s61 = ssub.s32 %s59, %s60
      %p62 = scmp.eq.s32.totalorder %s61, 0
      %s64 = sadd.s32 %s63, 1
      %s65 = scalar_select %p62, %s63, %s64
      %p68 = pneg %p62
      %p69 = scmp.eq.s32.totalorder %s11, 1
      %p70 = por %p68, %p69
      %p71 = scmp.ne.s32.totalorder %s63, %s66
      %p72 = scmp.eq.s32.totalorder %s11, 0
      %p73 = por %p71, %p72
      %p74 = scmp.ne.s32.totalorder %s63, %s66
      %p75 = scmp.eq.s32.totalorder %s16, 1
      %p76 = por %p74, %p75
      %p77 = scmp.ne.s32.totalorder %s66, %s67
      %p78 = scmp.eq.s32.totalorder %s16, 0
      %p79 = por %p77, %p78
      %p80 = scmp.ne.s32.totalorder %s66, %s67
      %p81 = scmp.eq.s32.totalorder %s17, 1
      %p82 = por %p80, %p81
      %p84 = scmp.ne.s32.totalorder %s67, %s83
      %p85 = scmp.eq.s32.totalorder %s17, 0
      %p86 = por %p84, %p85
      %s87 = ssub.s32 %s18, %s30
      %p88 = scmp.eq.s32.totalorder %s87, 0
      %s90 = sadd.s32 %s89, 1
      %s91 = scalar_select %p88, %s89, %s90
      %p94 = pneg %p88
      %p95 = scmp.eq.s32.totalorder %s11, 1
      %p96 = por %p94, %p95
      %p97 = scmp.ne.s32.totalorder %s89, %s92
      %p98 = scmp.eq.s32.totalorder %s11, 0
      %p99 = por %p97, %p98
      %p100 = scmp.ne.s32.totalorder %s89, %s92
      %p101 = scmp.eq.s32.totalorder %s16, 1
      %p102 = por %p100, %p101
      %p103 = scmp.ne.s32.totalorder %s92, %s93
      %p104 = scmp.eq.s32.totalorder %s16, 0
      %p105 = por %p103, %p104
      %p106 = scmp.ne.s32.totalorder %s92, %s93
      %p107 = scmp.eq.s32.totalorder %s17, 1
      %p108 = por %p106, %p107
      %p110 = scmp.ne.s32.totalorder %s93, %s109
      %p111 = scmp.eq.s32.totalorder %s17, 0
      %p112 = por %p110, %p111
      %p113 = scmp.le.s32.totalorder 1, %s11
      %p114 = scmp.lt.s32.totalorder %s11, 3
      %p115 = pnand %p113, %p114
      %p116 = pneg %p115
      // Predicated region
      $region9: #{tpu_custom_call.1} parent=5 // pred_check
        _
      $region10: #{tpu_custom_call.1} parent=5 // pred_check_branch
        %118 = sbr.rel (%p115) target = $region12
      $region11: #{tpu_custom_call.1} parent=5 // pred_region
        %s119 = ssub.s32 %s11, 1
      $region12: #{tpu_custom_call.1} parent=5 // pred_fallthru
        _
      %p120 = scmp.lt.s32.totalorder %s11, 2
      // Predicated region
      $region13: #{tpu_custom_call.1} parent=5 // pred_check
        %p121 = pneg %p120
      $region14: #{tpu_custom_call.1} parent=5 // pred_check_branch
        %123 = sbr.rel (%p121) target = $region16
      $region15: #{tpu_custom_call.1} parent=5 // pred_region
        // Predicated region
        $region17: #{tpu_custom_call.1} parent=15 // pred_check
          %p124 = pneg %p45
        $region18: #{tpu_custom_call.1} parent=15 // pred_check_branch
          %126 = sbr.rel (%p124) target = $region20
        $region19: #{tpu_custom_call.1} parent=15 // pred_region
          %s127 = sadd.s32 %s18, %s19
          %p128 = scmp.lt.s32.totalorder %s127, 1
          %s129 = scalar_select %p128, %s127, 1
          %s130 = smul.addr %s129, 8
          %s131 = scalar_lea.vmem %s0, %s130
          %s132 = sadd.s32 %s18, %s19
        $region20: #{tpu_custom_call.1} parent=15 // pred_fallthru
          _
        // Predicated region
        $region21: #{tpu_custom_call.1} parent=15 // pred_check
          %p133 = pneg %p73
        $region22: #{tpu_custom_call.1} parent=15 // pred_check_branch
          %135 = sbr.rel (%p133) target = $region24
        $region23: #{tpu_custom_call.1} parent=15 // pred_region
          %s136 = sadd.s32 %s18, %s19
          %p137 = scmp.lt.s32.totalorder %s136, 1
          %s138 = scalar_select %p137, %s136, 1
          %s139 = smul.addr %s138, 2
          %s140 = smul.addr %s139, 8
          %s141 = scalar_lea.vmem %s1, %s140
          %s142 = sadd.s32 %s18, %s19
        $region24: #{tpu_custom_call.1} parent=15 // pred_fallthru
          _
      $region16: #{tpu_custom_call.1} parent=5 // pred_fallthru
        _
      %p143 = scmp.le.s32.totalorder 1, %s11
      %p144 = scmp.lt.s32.totalorder %s11, 3
      %p145 = pnand %p143, %p144
      %p146 = pneg %p145
      // Predicated region
      $region25: #{tpu_custom_call.1} parent=5 // pred_check
        _
      $region26: #{tpu_custom_call.1} parent=5 // pred_check_branch
        %148 = sbr.rel (%p145) target = $region28
      $region27: #{tpu_custom_call.1} parent=5 // pred_region
        %s149 = ssub.s32 %s11, 1
        %s150 = sadd.s32 %s20, %s21
        %p151 = scmp.lt.s32.totalorder %s150, 1
        %s152 = scalar_select %p151, %s150, 1
        %s153 = smul.addr %s152, 8
        %s154 = scalar_lea.vmem %s0, %s153
        %p155 = pneg %p51
        %p156 = pneg %p48
        %s157 = sadd.s32 %s20, %s21
        %p158 = scmp.lt.s32.totalorder %s157, 1
        %s159 = scalar_select %p158, %s157, 1
        %s160 = smul.addr %s159, 2
        %s161 = smul.addr %s160, 8
        %s162 = scalar_lea.vmem %s1, %s161
        %p163 = pneg %p79
        %p164 = pneg %p76
        %p165 = pneg %p105
        %p166 = pneg %p102
        %s167 = sand.u32 %s92, 1
        %s168 = scalar_lea.sflag [#allocation3], %s167
        %s169 = sand.u32 %s92, 1
        %s170 = smul.addr %s169, 8
        %s171 = scalar_lea.vmem [#allocation2], %s170
        %s172 = sadd.s32 %s20, %s21
        %p173 = scmp.lt.s32.totalorder %s172, 1
        %s174 = scalar_select %p173, %s172, 1
        %s175 = smul.addr %s174, 8
        %s176 = scalar_lea.vmem %s0, %s175
        %s177 = sadd.s32 %s20, %s21
        %s178 = sadd.s32 %s20, %s21
        %p179 = scmp.lt.s32.totalorder %s178, 1
        %s180 = scalar_select %p179, %s178, 1
        %s181 = smul.addr %s180, 2
        %s182 = smul.addr %s181, 8
        %s183 = scalar_lea.vmem %s1, %s182
        %s184 = sadd.s32 %s20, %s21
        %p185 = scmp.eq.s32.totalorder %s21, 0
        // Predicated region
        $region29: #{tpu_custom_call.1} parent=27 // pred_check
          %p186 = pneg %p185
        $region30: #{tpu_custom_call.1} parent=27 // pred_check_branch
          %188 = sbr.rel (%p186) target = $region32
        $region31: #{tpu_custom_call.1} parent=27 // pred_region
          %vm189 = vcmask 261120
          %190 = vst.msk [vmem:[%s171] sm:$0xff] %vm189, 0.0
        $region32: #{tpu_custom_call.1} parent=27 // pred_fallthru
          _
        %v191 = vld [vmem:[%s176] sm:$0xff]
        %v192 = vld [vmem:[%s183] sm:$0xff]
        %v193 = vld [vmem:[%s183 + $0x8] sm:$0xf]
        %v194 = vadd.f32 %v191, 1e-16
        %v195 = vlog2.pop %v194
        %v196 = vmul.f32 %v195, 0.6931472
        %v198 = vrot.slane %v196, 4
        %v200 = vmul.f32 %v192, %v198
        %v201 = vmul.f32 %v193, %v198
        %vm204 = vcmask 1043456
        %v205 = vrot.slane %v200, 4
        %v206 = vrot.slane %v201, 4
        %v207 = vsel %vm204, %v205, %v206
        %v209 = vsub.f32 %v191, %v207
        %v210 = vld [vmem:[%s171] sm:$0xff]
        %v211 = vadd.f32 %v209, 0.0
        %v212 = vadd.f32 %v210, %v211
        %vm213 = vcmask 261120
        %214 = vst.msk [vmem:[%s171] sm:$0xff] %vm213, %v212
        %s215 = sand.u32 %s92, 1
        %s216 = scalar_lea.sflag [#allocation3], %s215
        %s217 = sand.u32 %s92, 1
        %s218 = smul.addr %s217, 8
        %s219 = scalar_lea.vmem [#allocation2], %s218
        // Predicated region
        $region33: #{tpu_custom_call.1} parent=27 // pred_check
          %p220 = pneg %p102
        $region34: #{tpu_custom_call.1} parent=27 // pred_check_branch
          %222 = sbr.rel (%p220) target = $region36
        $region35: #{tpu_custom_call.1} parent=27 // pred_region
          %s224 = ssub.s32 128, 128
          %225 = vsyncadd %s216, %s224
          %s226 = smul.addr %s20, 128
          %s227 = scalar_lea.hbm %s2, %s226
          %s229 = sshll.u32 %s219, 4
          %s230 = int_to_ptr.vmem [resolvable:$true] %s229
          %232 = dma.vmem_to_hbm [thread:$0]  %s230, 128, %s227, %s216
        $region36: #{tpu_custom_call.1} parent=27 // pred_fallthru
          _
      $region28: #{tpu_custom_call.1} parent=5 // pred_fallthru
        _
      %p233 = scmp.le.s32.totalorder 2, %s11
      // Predicated region
      $region37: #{tpu_custom_call.1} parent=5 // pred_check
        %p234 = pneg %p233
      $region38: #{tpu_custom_call.1} parent=5 // pred_check_branch
        %236 = sbr.rel (%p234) target = $region40
      $region39: #{tpu_custom_call.1} parent=5 // pred_region
        %s237 = ssub.s32 %s11, 2
        // Predicated region
        $region41: #{tpu_custom_call.1} parent=39 // pred_check
          %p238 = pneg %p108
        $region42: #{tpu_custom_call.1} parent=39 // pred_check_branch
          %240 = sbr.rel (%p238) target = $region44
        $region43: #{tpu_custom_call.1} parent=39 // pred_region
          %s241 = sand.u32 %s93, 1
          %s242 = scalar_lea.sflag [#allocation3], %s241
          %s243 = sand.u32 %s93, 1
          %s244 = smul.addr %s243, 8
          %s245 = scalar_lea.vmem [#allocation2], %s244
          %246 = dma.done %s242, 128
        $region44: #{tpu_custom_call.1} parent=39 // pred_fallthru
          _
      $region40: #{tpu_custom_call.1} parent=5 // pred_fallthru
        _
    $region6: #{tpu_custom_call.1} parent=1 // loop_footer
      %s15 = sadd.s32 1, %s11
    $region7: #{tpu_custom_call.1} parent=1 // loop_footer_branch
      %10 = sbr.rel target = $region3
    $region8: #{tpu_custom_call.1} parent=1 // loop_exit
      _
    %247 = vsyncpa [#allocation3], 1
    %s248 = scalar_lea.sflag [#allocation3], 1
    %249 = vsyncpa %s248, 1

</llo_original>
